<compile_context>
chip_gen: v7x
topology: tpu7x:2x2x1
jax: 0.10.0
libtpu: 0.0.40
codegen_flags: <defaults>
</compile_context>

<pallas_src>
import functools

import jax
import jax.numpy as jnp
from jax.experimental import pallas as pl
from jax.experimental.pallas import tpu as pltpu


def _round_up(x, m):
    return (x + m - 1) // m * m


def _choose_block(batch, in_dim, itemsize, block_cap):
    """Batch-tile rows per grid step (batch lives on the sublane axis)."""
    # Cap the per-buffer x tile at ~8 MiB so double-buffered x (+ out) stays
    # comfortably inside v7x's 64 MiB VMEM / 32 MiB scoped default.
    vmem_rows = max(8, ((8 * 1024 * 1024) // (in_dim * itemsize)) // 8 * 8)
    cap = min(vmem_rows, _round_up(block_cap, 8)) if block_cap else vmem_rows
    if batch <= 1024 and batch <= cap:
        return batch  # single grid step, full-extent block (always legal)
    # Two balanced "parallel" steps: feeds both v7x TensorCores; costs only
    # ~0.35 us extra on single-core v5e/v6e.
    block = _round_up(pl.cdiv(batch, 2), 8)
    return min(block, cap)


def dqn_kernel(x_ref, w1_ref, b1_ref, w2_ref, b2_ref, w3_ref, b3_ref, o_ref):
    """Fused fc1 -> relu -> fc2 -> relu -> fc3 on one (block, in_dim) slab.

    x_ref:  (block, in_dim)   batch rows on the sublane axis
    wN_ref: (in_f, out_f)     pre-transposed, MXU compute dtype
    bN_ref: (1, out_f)        f32 row, broadcasts over the batch rows
    o_ref:  (block, out_dim)
    """
    cdt = w1_ref.dtype  # MXU input dtype (bf16 by default, f32 for checking)
    x = x_ref[...].astype(cdt)

    h1 = jnp.dot(x, w1_ref[...], preferred_element_type=jnp.float32) + b1_ref[...]
    h1 = jnp.maximum(h1, 0.0)

    h2 = jnp.dot(h1.astype(cdt), w2_ref[...],
                 preferred_element_type=jnp.float32) + b2_ref[...]
    h2 = jnp.maximum(h2, 0.0)

    out = jnp.dot(h2.astype(cdt), w3_ref[...],
                  preferred_element_type=jnp.float32) + b3_ref[...]
    o_ref[...] = out.astype(o_ref.dtype)


@functools.partial(jax.jit, static_argnames=("block_b", "compute_dtype"))
def dqn_forward(x, w1, b1, w2, b2, w3, b3, *, block_b=None,
                compute_dtype=jnp.bfloat16):
    """DQN forward. x: (B, input_dim); weights in PyTorch (out, in) layout."""
    B, in_dim = x.shape
    out_dim = w3.shape[0]

    block = _choose_block(B, in_dim, x.dtype.itemsize, block_b)
    grid = pl.cdiv(B, block)  # trailing partial block handled by Pallas

    # Tiny (<3 KiB) one-time param prep: transpose to (in, out) so the kernel
    # is plain row-major matmuls; cast weights to MXU dtype, keep biases f32.
    w1c, w2c, w3c = (w.T.astype(compute_dtype) for w in (w1, w2, w3))
    b1c, b2c, b3c = (b.astype(jnp.float32).reshape(1, -1) for b in (b1, b2, b3))

    # Parameters are grid-invariant: full tensors, constant block index
    # (the pipeline skips the re-DMA when the block index doesn't change).
    full = lambda a: pl.BlockSpec(a.shape, lambda i: (0, 0))

    return pl.pallas_call(
        dqn_kernel,
        out_shape=jax.ShapeDtypeStruct((B, out_dim), x.dtype),
        grid_spec=pltpu.PrefetchScalarGridSpec(
            num_scalar_prefetch=0,
            grid=(grid,),
            in_specs=[
                pl.BlockSpec((block, in_dim), lambda i: (i, 0)),
                full(w1c), full(b1c), full(w2c), full(b2c), full(w3c), full(b3c),
            ],
            out_specs=pl.BlockSpec((block, out_dim), lambda i: (i, 0)),
        ),
        compiler_params=pltpu.CompilerParams(
            dimension_semantics=("parallel",),        # megacore-shardable axis
            vmem_limit_bytes=32 * 1024 * 1024,        # safe on v7x (64 MiB phys)
        ),
    )(x, w1c, b1c, w2c, b2c, w3c, b3c)


def init_dqn_params(key, input_dim, output_dim):
    """nn.Linear-style init, PyTorch layout: W (out, in), b (out,)."""
    dims = [(input_dim, 16), (16, 32), (32, output_dim)]
    params = []
    keys = jax.random.split(key, 2 * len(dims))
    for li, (fan_in, fan_out) in enumerate(dims):
        bound = 1.0 / jnp.sqrt(jnp.float32(fan_in))
        w = jax.random.uniform(keys[2 * li], (fan_out, fan_in), jnp.float32,
                               -bound, bound)
        b = jax.random.uniform(keys[2 * li + 1], (fan_out,), jnp.float32,
                               -bound, bound)
        params.extend([w, b])
    return params


def dqn_reference(x, w1, b1, w2, b2, w3, b3):
    h1 = jnp.maximum(x @ w1.T + b1, 0.0)
    h2 = jnp.maximum(h1 @ w2.T + b2, 0.0)
    return h2 @ w3.T + b3


if __name__ == "__main__":
    key = jax.random.PRNGKey(0)
    k_x, k_p, k_x2 = jax.random.split(key, 3)

    batch, input_dim, output_dim = 64, 32, 8
    x = jax.random.normal(k_x, (batch, input_dim), jnp.float32)
    params = init_dqn_params(k_p, input_dim, output_dim)
    ref = dqn_reference(x, *params)

    # Default (fast) path: bf16 MXU inputs, f32 accumulation / bias / ReLU.
    out = jax.block_until_ready(dqn_forward(x, *params))
    assert out.shape == (batch, output_dim), out.shape
    assert jnp.allclose(out, ref, atol=5e-2, rtol=5e-2), "bf16 mismatch vs reference"

    # Exact structural check via the f32 compute path.
    out_f32 = jax.block_until_ready(
        dqn_forward(x, *params, compute_dtype=jnp.float32))
    assert jnp.allclose(out_f32, ref, atol=1e-4, rtol=1e-4), "f32 mismatch vs reference"

    # Odd batch (no wrapper-side padding; full-extent block).
    x2 = jax.random.normal(k_x2, (50, input_dim), jnp.float32)
    out2 = jax.block_until_ready(
        dqn_forward(x2, *params, compute_dtype=jnp.float32))
    assert jnp.allclose(out2, dqn_reference(x2, *params), atol=1e-4, rtol=1e-4), \
        "odd-batch mismatch vs reference"

    print("KERNEL_OK")
</pallas_src>

<mosaic_0001>
module attributes {stable_mosaic.version = 11 : i64} {
  func.func @dqn_kernel(%arg0: i32, %arg1: memref<64x32xf32, #tpu.memory_space<vmem>>, %arg2: memref<32x16xbf16, #tpu.memory_space<vmem>>, %arg3: memref<1x16xf32, #tpu.memory_space<vmem>>, %arg4: memref<16x32xbf16, #tpu.memory_space<vmem>>, %arg5: memref<1x32xf32, #tpu.memory_space<vmem>>, %arg6: memref<32x8xbf16, #tpu.memory_space<vmem>>, %arg7: memref<1x8xf32, #tpu.memory_space<vmem>>, %arg8: memref<64x8xf32, #tpu.memory_space<vmem>>) attributes {dimension_semantics = [#tpu.dimension_semantics<parallel>], iteration_bounds = array<i64: 1>, scalar_prefetch = 0 : i64, scratch_operands = 0 : i64, tpu.core_type = #tpu.core_type<tc>, window_params = [{transform_indices = @transform_0, window_bounds = array<i64: 64, 32>}, {pipeline_mode = #tpu.pipeline_mode<synchronous>, transform_indices = @transform_1, window_bounds = array<i64: 32, 16>}, {pipeline_mode = #tpu.pipeline_mode<synchronous>, transform_indices = @transform_2, window_bounds = array<i64: 1, 16>}, {pipeline_mode = #tpu.pipeline_mode<synchronous>, transform_indices = @transform_3, window_bounds = array<i64: 16, 32>}, {pipeline_mode = #tpu.pipeline_mode<synchronous>, transform_indices = @transform_4, window_bounds = array<i64: 1, 32>}, {pipeline_mode = #tpu.pipeline_mode<synchronous>, transform_indices = @transform_5, window_bounds = array<i64: 32, 8>}, {pipeline_mode = #tpu.pipeline_mode<synchronous>, transform_indices = @transform_6, window_bounds = array<i64: 1, 8>}, {transform_indices = @transform_7, window_bounds = array<i64: 64, 8>}]} {
    %c0 = arith.constant 0 : index
    %c0_0 = arith.constant 0 : index
    %0 = vector.load %arg1[%c0, %c0_0] : memref<64x32xf32, #tpu.memory_space<vmem>>, vector<64x32xf32>
    %1 = arith.truncf %0 : vector<64x32xf32> to vector<64x32xbf16>
    %c0_1 = arith.constant 0 : index
    %c0_2 = arith.constant 0 : index
    %2 = vector.load %arg2[%c0_1, %c0_2] : memref<32x16xbf16, #tpu.memory_space<vmem>>, vector<32x16xbf16>
    %cst = arith.constant dense<0.000000e+00> : vector<64x16xf32>
    %3 = tpu.matmul %1, %2, %cst {dimension_numbers = #tpu.dot_dimension_numbers<[1], [0], [0], [1], [0, 0, 1, 1], [], []>} : vector<64x32xbf16>, vector<32x16xbf16>, vector<64x16xf32> -> vector<64x16xf32>
    %c0_3 = arith.constant 0 : index
    %c0_4 = arith.constant 0 : index
    %4 = vector.load %arg3[%c0_3, %c0_4] : memref<1x16xf32, #tpu.memory_space<vmem>>, vector<1x16xf32>
    %5 = vector.broadcast %4 : vector<1x16xf32> to vector<64x16xf32>
    %6 = arith.addf %3, %5 : vector<64x16xf32>
    %cst_5 = arith.constant 0.000000e+00 : f32
    %7 = vector.broadcast %cst_5 : f32 to vector<64x16xf32>
    %8 = arith.maximumf %6, %7 : vector<64x16xf32>
    %9 = arith.truncf %8 : vector<64x16xf32> to vector<64x16xbf16>
    %c0_6 = arith.constant 0 : index
    %c0_7 = arith.constant 0 : index
    %10 = vector.load %arg4[%c0_6, %c0_7] : memref<16x32xbf16, #tpu.memory_space<vmem>>, vector<16x32xbf16>
    %cst_8 = arith.constant dense<0.000000e+00> : vector<64x32xf32>
    %11 = tpu.matmul %9, %10, %cst_8 {dimension_numbers = #tpu.dot_dimension_numbers<[1], [0], [0], [1], [0, 0, 1, 1], [], []>} : vector<64x16xbf16>, vector<16x32xbf16>, vector<64x32xf32> -> vector<64x32xf32>
    %c0_9 = arith.constant 0 : index
    %c0_10 = arith.constant 0 : index
    %12 = vector.load %arg5[%c0_9, %c0_10] : memref<1x32xf32, #tpu.memory_space<vmem>>, vector<1x32xf32>
    %13 = vector.broadcast %12 : vector<1x32xf32> to vector<64x32xf32>
    %14 = arith.addf %11, %13 : vector<64x32xf32>
    %cst_11 = arith.constant 0.000000e+00 : f32
    %15 = vector.broadcast %cst_11 : f32 to vector<64x32xf32>
    %16 = arith.maximumf %14, %15 : vector<64x32xf32>
    %17 = arith.truncf %16 : vector<64x32xf32> to vector<64x32xbf16>
    %c0_12 = arith.constant 0 : index
    %c0_13 = arith.constant 0 : index
    %18 = vector.load %arg6[%c0_12, %c0_13] : memref<32x8xbf16, #tpu.memory_space<vmem>>, vector<32x8xbf16>
    %cst_14 = arith.constant dense<0.000000e+00> : vector<64x8xf32>
    %19 = tpu.matmul %17, %18, %cst_14 {dimension_numbers = #tpu.dot_dimension_numbers<[1], [0], [0], [1], [0, 0, 1, 1], [], []>} : vector<64x32xbf16>, vector<32x8xbf16>, vector<64x8xf32> -> vector<64x8xf32>
    %c0_15 = arith.constant 0 : index
    %c0_16 = arith.constant 0 : index
    %20 = vector.load %arg7[%c0_15, %c0_16] : memref<1x8xf32, #tpu.memory_space<vmem>>, vector<1x8xf32>
    %21 = vector.broadcast %20 : vector<1x8xf32> to vector<64x8xf32>
    %22 = arith.addf %19, %21 : vector<64x8xf32>
    %c0_17 = arith.constant 0 : index
    %c0_18 = arith.constant 0 : index
    %23 = vector.load %arg8[%c0_17, %c0_18] : memref<64x8xf32, #tpu.memory_space<vmem>>, vector<64x8xf32>
    tpu.vector_store %arg8[%c0_17, %c0_18], %22 {strides = array<i32>} : memref<64x8xf32, #tpu.memory_space<vmem>>, vector<64x8xf32>,
    return
  }
  func.func @transform_0(%arg0: i32) -> (i32, i32) {
    %c0_i32 = arith.constant 0 : i32
    %c0_i32_0 = arith.constant 0 : i32
    return %arg0, %c0_i32 : i32, i32
  }
  func.func @transform_1(%arg0: i32) -> (i32, i32) {
    %c0_i32 = arith.constant 0 : i32
    %c0_i32_0 = arith.constant 0 : i32
    %c0_i32_1 = arith.constant 0 : i32
    return %c0_i32, %c0_i32_0 : i32, i32
  }
  func.func @transform_2(%arg0: i32) -> (i32, i32) {
    %c0_i32 = arith.constant 0 : i32
    %c0_i32_0 = arith.constant 0 : i32
    %c0_i32_1 = arith.constant 0 : i32
    return %c0_i32, %c0_i32_0 : i32, i32
  }
  func.func @transform_3(%arg0: i32) -> (i32, i32) {
    %c0_i32 = arith.constant 0 : i32
    %c0_i32_0 = arith.constant 0 : i32
    %c0_i32_1 = arith.constant 0 : i32
    return %c0_i32, %c0_i32_0 : i32, i32
  }
  func.func @transform_4(%arg0: i32) -> (i32, i32) {
    %c0_i32 = arith.constant 0 : i32
    %c0_i32_0 = arith.constant 0 : i32
    %c0_i32_1 = arith.constant 0 : i32
    return %c0_i32, %c0_i32_0 : i32, i32
  }
  func.func @transform_5(%arg0: i32) -> (i32, i32) {
    %c0_i32 = arith.constant 0 : i32
    %c0_i32_0 = arith.constant 0 : i32
    %c0_i32_1 = arith.constant 0 : i32
    return %c0_i32, %c0_i32_0 : i32, i32
  }
  func.func @transform_6(%arg0: i32) -> (i32, i32) {
    %c0_i32 = arith.constant 0 : i32
    %c0_i32_0 = arith.constant 0 : i32
    %c0_i32_1 = arith.constant 0 : i32
    return %c0_i32, %c0_i32_0 : i32, i32
  }
  func.func @transform_7(%arg0: i32) -> (i32, i32) {
    %c0_i32 = arith.constant 0 : i32
    %c0_i32_0 = arith.constant 0 : i32
    return %arg0, %c0_i32 : i32, i32
  }
}

</mosaic_0001>

<llo_original>
// kernel: dqn_forward.1
$region0: #{dqn_forward.1}
  #allocation0 [shape = 'u32[]', space=smem, size = 0x4, offset = 0x4, fixed_abs, tag = 'smem constant byte address 0x4 - core index']
  #allocation1 [shape = 'u32[144,128]{1,0:T(1,128)}', space=vmem, size = 0x12000, scoped, tag = 'internal scratch']
  %s0 = inlined_call_operand.vmem [shape: f32[64,32], index: 0, kind: input, shape index: {}]
  %s1 = inlined_call_operand.vmem [shape: bf16[32,16], index: 1, kind: input, shape index: {}]
  %s2 = inlined_call_operand.vmem [shape: f32[1,16], index: 2, kind: input, shape index: {}]
  %s3 = inlined_call_operand.vmem [shape: bf16[16,32], index: 3, kind: input, shape index: {}]
  %s4 = inlined_call_operand.vmem [shape: f32[1,32], index: 4, kind: input, shape index: {}]
  %s5 = inlined_call_operand.vmem [shape: bf16[32,8], index: 5, kind: input, shape index: {}]
  %s6 = inlined_call_operand.vmem [shape: f32[1,8], index: 6, kind: input, shape index: {}]
  %s7 = inlined_call_operand.vmem [shape: f32[64,8], index: 7, kind: output, shape index: {}]
  %s8 = sld [smem:[#allocation0]]
  $region38: #{dqn_forward.1} parent=0
    _
  %s10 = ssub.s32 1, %s8
  %s11 = scalar_select 0, %s10, %s8
  // Predicated region
  $region2: #{dqn_forward.1} parent=0 // pred_check
    _
  $region3: #{dqn_forward.1} parent=0 // pred_check_branch
    %13 = sbr.rel (0) target = $region5
  $region4: #{dqn_forward.1} parent=0 // pred_region
    _
  $region5: #{dqn_forward.1} parent=0 // pred_fallthru
    _
  // Predicated region
  $region6: #{dqn_forward.1} parent=0 // pred_check
    _
  $region7: #{dqn_forward.1} parent=0 // pred_check_branch
    %15 = sbr.rel (0) target = $region9
  $region8: #{dqn_forward.1} parent=0 // pred_region
    _
  $region9: #{dqn_forward.1} parent=0 // pred_fallthru
    _
  // Predicated region
  $region10: #{dqn_forward.1} parent=0 // pred_check
    _
  $region11: #{dqn_forward.1} parent=0 // pred_check_branch
    %17 = sbr.rel (0) target = $region13
  $region12: #{dqn_forward.1} parent=0 // pred_region
    _
  $region13: #{dqn_forward.1} parent=0 // pred_fallthru
    _
  // Predicated region
  $region14: #{dqn_forward.1} parent=0 // pred_check
    _
  $region15: #{dqn_forward.1} parent=0 // pred_check_branch
    %19 = sbr.rel (0) target = $region17
  $region16: #{dqn_forward.1} parent=0 // pred_region
    _
  $region17: #{dqn_forward.1} parent=0 // pred_fallthru
    _
  // Predicated region
  $region18: #{dqn_forward.1} parent=0 // pred_check
    _
  $region19: #{dqn_forward.1} parent=0 // pred_check_branch
    %21 = sbr.rel (0) target = $region21
  $region20: #{dqn_forward.1} parent=0 // pred_region
    _
  $region21: #{dqn_forward.1} parent=0 // pred_fallthru
    _
  // Predicated region
  $region22: #{dqn_forward.1} parent=0 // pred_check
    _
  $region23: #{dqn_forward.1} parent=0 // pred_check_branch
    %23 = sbr.rel (0) target = $region25
  $region24: #{dqn_forward.1} parent=0 // pred_region
    _
  $region25: #{dqn_forward.1} parent=0 // pred_fallthru
    _
  // Predicated region
  $region26: #{dqn_forward.1} parent=0 // pred_check
    _
  $region27: #{dqn_forward.1} parent=0 // pred_check_branch
    %25 = sbr.rel (0) target = $region29
  $region28: #{dqn_forward.1} parent=0 // pred_region
    _
  $region29: #{dqn_forward.1} parent=0 // pred_fallthru
    _
  %v27 = vld [vmem:[%s0] sm:$0xff]
  %v28 = vld [vmem:[%s0 + $0x8] sm:$0xff]
  %v29 = vld [vmem:[%s0 + $0x10] sm:$0xff]
  %v30 = vld [vmem:[%s0 + $0x18] sm:$0xff]
  %v31 = vld [vmem:[%s0 + $0x20] sm:$0xff]
  %v32 = vld [vmem:[%s0 + $0x28] sm:$0xff]
  %v33 = vld [vmem:[%s0 + $0x30] sm:$0xff]
  %v34 = vld [vmem:[%s0 + $0x38] sm:$0xff]
  %v35 = vpack.c.bf16 %v28, %v27
  %v36 = vpack.c.bf16 %v30, %v29
  %v37 = vpack.c.bf16 %v32, %v31
  %v38 = vpack.c.bf16 %v34, %v33
  %v39 = vld [vmem:[%s1] sm:$0xf]
  %v40 = vld [vmem:[%s1 + $0x4] sm:$0xf]
  %v41 = vld [vmem:[%s1 + $0x8] sm:$0xf]
  %v42 = vld [vmem:[%s1 + $0xc] sm:$0xf]
  %v43 = vld [vmem:[%s2] sm:$0x1]
  %v45 = vlaneseq
  %v46 = vshrl.u32 %v45, 7
  %v47 = vsub.s32 0, %v46
  %v48 = vrot.slane %v43, %v47
  %v54 = vunpack.c.l.b16 %v39
  %v55 = vunpack.c.l.b16 %v40
  %v56 = vunpack.c.l.b16 %v41
  %v57 = vunpack.c.l.b16 %v42
  %v58 = vpack.c.b16 %v55, %v54
  %v59 = vpack.c.b16 %v57, %v56
  %vm62 = vcmask 261120
  %v64 = vsel %vm62, %v35, 0
  %v67 = vsel %vm62, %v36, 0
  %v70 = vsel %vm62, %v37, 0
  %v73 = vsel %vm62, %v38, 0
  %75 = vmatprep.subr.bf16.mxu0 0
  %76 = vmatpush1.bf16.msra.mxu0 %v58
  %77 = vmatprep.subr.bf16.mxu0 0
  %78 = vmatpush1.bf16.msra.mxu0 %v59
  %79 = vmatprep.subr.bf16.mxu0 0
  %80 = vmatpush1.bf16.msra.mxu0 0
  %81 = vmatprep.subr.bf16.mxu0 0
  %82 = vmatpush1.bf16.msra.mxu0 0
  %83 = vmatprep.subr.bf16.mxu0 0
  %84 = vmatpush1.bf16.msra.mxu0 0
  %85 = vmatprep.subr.bf16.mxu0 0
  %86 = vmatpush1.bf16.msra.mxu0 0
  %87 = vmatprep.subr.bf16.mxu0 0
  %88 = vmatpush1.bf16.msra.mxu0 0
  %89 = vmatprep.subr.bf16.mxu0 0
  %90 = vmatpush1.bf16.msra.mxu0 0
  %91 = vmatprep.subr.bf16.mxu0 0
  %92 = vmatpush1.bf16.msra.mxu0 0
  %93 = vmatprep.subr.bf16.mxu0 0
  %94 = vmatpush1.bf16.msra.mxu0 0
  %95 = vmatprep.subr.bf16.mxu0 0
  %96 = vmatpush1.bf16.msra.mxu0 0
  %97 = vmatprep.subr.bf16.mxu0 0
  %98 = vmatpush1.bf16.msra.mxu0 0
  %99 = vmatprep.subr.bf16.mxu0 0
  %100 = vmatpush1.bf16.msra.mxu0 0
  %101 = vmatprep.subr.bf16.mxu0 0
  %102 = vmatpush1.bf16.msra.mxu0 0
  %103 = vmatprep.subr.bf16.mxu0 0
  %104 = vmatpush1.bf16.msra.mxu0 0
  %105 = vmatprep.subr.bf16.mxu0 0
  %106 = vmatpush1.bf16.msra.mxu0 0
  %107 = vmatprep.mubr.bf16.mxu0 0
  %108 = vmatmul.mubr.bf16.gmra.mrb[0].mxu0 %v64
  %v109 = vpop.f32.mrb[0].mxu0
  %v110 = vadd.f32 %v48, %v109
  %v111 = vpop.f32.mrb[0].mxu0
  %v112 = vpop.f32.mrb[0].mxu0
  %v113 = vadd.f32 %v48, %v112
  %v114 = vpop.f32.mrb[0].mxu0
  %115 = vmatprep.mubr.bf16.mxu0 0
  %116 = vmatmul.mubr.bf16.gmra.mrb[0].mxu0 %v67
  %v117 = vpop.f32.mrb[0].mxu0
  %v118 = vadd.f32 %v48, %v117
  %v119 = vpop.f32.mrb[0].mxu0
  %v120 = vpop.f32.mrb[0].mxu0
  %v121 = vadd.f32 %v48, %v120
  %v122 = vpop.f32.mrb[0].mxu0
  %123 = vmatprep.mubr.bf16.mxu0 0
  %124 = vmatmul.mubr.bf16.gmra.mrb[0].mxu0 %v70
  %v125 = vpop.f32.mrb[0].mxu0
  %v126 = vadd.f32 %v48, %v125
  %v127 = vpop.f32.mrb[0].mxu0
  %v128 = vpop.f32.mrb[0].mxu0
  %v129 = vadd.f32 %v48, %v128
  %v130 = vpop.f32.mrb[0].mxu0
  %131 = vmatprep.mubr.bf16.mxu0 0
  %132 = vmatmul.mubr.bf16.gmra.mrb[0].mxu0 %v73
  %v133 = vpop.f32.mrb[0].mxu0
  %v134 = vadd.f32 %v48, %v133
  %v135 = vpop.f32.mrb[0].mxu0
  %v136 = vpop.f32.mrb[0].mxu0
  %v137 = vadd.f32 %v48, %v136
  %v138 = vpop.f32.mrb[0].mxu0
  %139 = vdwg.mxu0
  %v140 = vmax.f32 %v110, 0.0
  %v141 = vmax.f32 %v113, 0.0
  %v142 = vmax.f32 %v118, 0.0
  %v143 = vmax.f32 %v121, 0.0
  %v144 = vmax.f32 %v126, 0.0
  %v145 = vmax.f32 %v129, 0.0
  %v146 = vmax.f32 %v134, 0.0
  %v147 = vmax.f32 %v137, 0.0
  %v148 = vpack.c.bf16 %v141, %v140
  %v149 = vpack.c.bf16 %v143, %v142
  %v150 = vpack.c.bf16 %v145, %v144
  %v151 = vpack.c.bf16 %v147, %v146
  %v152 = vld [vmem:[%s3] sm:$0xf]
  %v153 = vld [vmem:[%s3 + $0x4] sm:$0xf]
  %v154 = vld [vmem:[%s4] sm:$0x1]
  %v156 = vlaneseq
  %v157 = vshrl.u32 %v156, 7
  %v158 = vsub.s32 0, %v157
  %v159 = vrot.slane %v154, %v158
  %v163 = vunpack.c.l.b16 %v152
  %v164 = vunpack.c.l.b16 %v153
  %v165 = vpack.c.b16 %v164, %v163
  %vm167 = vcmask 130048
  %v169 = vsel %vm167, %v148, 0
  %v172 = vsel %vm167, %v149, 0
  %v175 = vsel %vm167, %v150, 0
  %v178 = vsel %vm167, %v151, 0
  %180 = vmatprep.subr.bf16.mxu0 0
  %181 = vmatpush1.bf16.msra.mxu0 %v165
  %182 = vmatprep.subr.bf16.mxu0 0
  %183 = vmatpush1.bf16.msra.mxu0 0
  %184 = vmatprep.subr.bf16.mxu0 0
  %185 = vmatpush1.bf16.msra.mxu0 0
  %186 = vmatprep.subr.bf16.mxu0 0
  %187 = vmatpush1.bf16.msra.mxu0 0
  %188 = vmatprep.subr.bf16.mxu0 0
  %189 = vmatpush1.bf16.msra.mxu0 0
  %190 = vmatprep.subr.bf16.mxu0 0
  %191 = vmatpush1.bf16.msra.mxu0 0
  %192 = vmatprep.subr.bf16.mxu0 0
  %193 = vmatpush1.bf16.msra.mxu0 0
  %194 = vmatprep.subr.bf16.mxu0 0
  %195 = vmatpush1.bf16.msra.mxu0 0
  %196 = vmatprep.subr.bf16.mxu0 0
  %197 = vmatpush1.bf16.msra.mxu0 0
  %198 = vmatprep.subr.bf16.mxu0 0
  %199 = vmatpush1.bf16.msra.mxu0 0
  %200 = vmatprep.subr.bf16.mxu0 0
  %201 = vmatpush1.bf16.msra.mxu0 0
  %202 = vmatprep.subr.bf16.mxu0 0
  %203 = vmatpush1.bf16.msra.mxu0 0
  %204 = vmatprep.subr.bf16.mxu0 0
  %205 = vmatpush1.bf16.msra.mxu0 0
  %206 = vmatprep.subr.bf16.mxu0 0
  %207 = vmatpush1.bf16.msra.mxu0 0
  %208 = vmatprep.subr.bf16.mxu0 0
  %209 = vmatpush1.bf16.msra.mxu0 0
  %210 = vmatprep.subr.bf16.mxu0 0
  %211 = vmatpush1.bf16.msra.mxu0 0
  %212 = vmatprep.mubr.bf16.mxu0 0
  %213 = vmatmul.mubr.bf16.gmra.mrb[0].mxu0 %v169
  %v214 = vpop.f32.mrb[0].mxu0
  %v215 = vadd.f32 %v159, %v214
  %v216 = vpop.f32.mrb[0].mxu0
  %v217 = vpop.f32.mrb[0].mxu0
  %v218 = vadd.f32 %v159, %v217
  %v219 = vpop.f32.mrb[0].mxu0
  %220 = vmatprep.mubr.bf16.mxu0 0
  %221 = vmatmul.mubr.bf16.gmra.mrb[0].mxu0 %v172
  %v222 = vpop.f32.mrb[0].mxu0
  %v223 = vadd.f32 %v159, %v222
  %v224 = vpop.f32.mrb[0].mxu0
  %v225 = vpop.f32.mrb[0].mxu0
  %v226 = vadd.f32 %v159, %v225
  %v227 = vpop.f32.mrb[0].mxu0
  %228 = vmatprep.mubr.bf16.mxu0 0
  %229 = vmatmul.mubr.bf16.gmra.mrb[0].mxu0 %v175
  %v230 = vpop.f32.mrb[0].mxu0
  %v231 = vadd.f32 %v159, %v230
  %v232 = vpop.f32.mrb[0].mxu0
  %v233 = vpop.f32.mrb[0].mxu0
  %v234 = vadd.f32 %v159, %v233
  %v235 = vpop.f32.mrb[0].mxu0
  %236 = vmatprep.mubr.bf16.mxu0 0
  %237 = vmatmul.mubr.bf16.gmra.mrb[0].mxu0 %v178
  %v238 = vpop.f32.mrb[0].mxu0
  %v239 = vadd.f32 %v159, %v238
  %v240 = vpop.f32.mrb[0].mxu0
  %v241 = vpop.f32.mrb[0].mxu0
  %v242 = vadd.f32 %v159, %v241
  %v243 = vpop.f32.mrb[0].mxu0
  %244 = vdwg.mxu0
  %v245 = vmax.f32 %v215, 0.0
  %v246 = vmax.f32 %v218, 0.0
  %v247 = vmax.f32 %v223, 0.0
  %v248 = vmax.f32 %v226, 0.0
  %v249 = vmax.f32 %v231, 0.0
  %v250 = vmax.f32 %v234, 0.0
  %v251 = vmax.f32 %v239, 0.0
  %v252 = vmax.f32 %v242, 0.0
  %v253 = vpack.c.bf16 %v246, %v245
  %v254 = vpack.c.bf16 %v248, %v247
  %v255 = vpack.c.bf16 %v250, %v249
  %v256 = vpack.c.bf16 %v252, %v251
  %v257 = vld [vmem:[%s5] sm:$0xf]
  %v258 = vld [vmem:[%s5 + $0x4] sm:$0xf]
  %v259 = vld [vmem:[%s5 + $0x8] sm:$0xf]
  %v260 = vld [vmem:[%s5 + $0xc] sm:$0xf]
  %v261 = vld [vmem:[%s6] sm:$0x1]
  %v263 = vlaneseq
  %v264 = vshrl.u32 %v263, 7
  %v265 = vsub.s32 0, %v264
  %v266 = vrot.slane %v261, %v265
  %v272 = vunpack.c.l.b16 %v257
  %v273 = vunpack.c.l.b16 %v258
  %v274 = vunpack.c.l.b16 %v259
  %v275 = vunpack.c.l.b16 %v260
  %v276 = vpack.c.b16 %v273, %v272
  %v277 = vpack.c.b16 %v275, %v274
  %v281 = vsel %vm62, %v253, 0
  %v284 = vsel %vm62, %v254, 0
  %v287 = vsel %vm62, %v255, 0
  %v290 = vsel %vm62, %v256, 0
  %292 = vmatprep.subr.bf16.mxu0 0
  %293 = vmatpush1.bf16.msra.mxu0 %v276
  %294 = vmatprep.subr.bf16.mxu0 0
  %295 = vmatpush1.bf16.msra.mxu0 %v277
  %296 = vmatprep.subr.bf16.mxu0 0
  %297 = vmatpush1.bf16.msra.mxu0 0
  %298 = vmatprep.subr.bf16.mxu0 0
  %299 = vmatpush1.bf16.msra.mxu0 0
  %300 = vmatprep.subr.bf16.mxu0 0
  %301 = vmatpush1.bf16.msra.mxu0 0
  %302 = vmatprep.subr.bf16.mxu0 0
  %303 = vmatpush1.bf16.msra.mxu0 0
  %304 = vmatprep.subr.bf16.mxu0 0
  %305 = vmatpush1.bf16.msra.mxu0 0
  %306 = vmatprep.subr.bf16.mxu0 0
  %307 = vmatpush1.bf16.msra.mxu0 0
  %308 = vmatprep.subr.bf16.mxu0 0
  %309 = vmatpush1.bf16.msra.mxu0 0
  %310 = vmatprep.subr.bf16.mxu0 0
  %311 = vmatpush1.bf16.msra.mxu0 0
  %312 = vmatprep.subr.bf16.mxu0 0
  %313 = vmatpush1.bf16.msra.mxu0 0
  %314 = vmatprep.subr.bf16.mxu0 0
  %315 = vmatpush1.bf16.msra.mxu0 0
  %316 = vmatprep.subr.bf16.mxu0 0
  %317 = vmatpush1.bf16.msra.mxu0 0
  %318 = vmatprep.subr.bf16.mxu0 0
  %319 = vmatpush1.bf16.msra.mxu0 0
  %320 = vmatprep.subr.bf16.mxu0 0
  %321 = vmatpush1.bf16.msra.mxu0 0
  %322 = vmatprep.subr.bf16.mxu0 0
  %323 = vmatpush1.bf16.msra.mxu0 0
  %324 = vmatprep.mubr.bf16.mxu0 0
  %325 = vmatmul.mubr.bf16.gmra.mrb[0].mxu0 %v281
  %v326 = vpop.f32.mrb[0].mxu0
  %v327 = vadd.f32 %v266, %v326
  %v328 = vpop.f32.mrb[0].mxu0
  %v329 = vpop.f32.mrb[0].mxu0
  %v330 = vadd.f32 %v266, %v329
  %v331 = vpop.f32.mrb[0].mxu0
  %332 = vmatprep.mubr.bf16.mxu0 0
  %333 = vmatmul.mubr.bf16.gmra.mrb[0].mxu0 %v284
  %v334 = vpop.f32.mrb[0].mxu0
  %v335 = vadd.f32 %v266, %v334
  %v336 = vpop.f32.mrb[0].mxu0
  %v337 = vpop.f32.mrb[0].mxu0
  %v338 = vadd.f32 %v266, %v337
  %v339 = vpop.f32.mrb[0].mxu0
  %340 = vmatprep.mubr.bf16.mxu0 0
  %341 = vmatmul.mubr.bf16.gmra.mrb[0].mxu0 %v287
  %v342 = vpop.f32.mrb[0].mxu0
  %v343 = vadd.f32 %v266, %v342
  %v344 = vpop.f32.mrb[0].mxu0
  %v345 = vpop.f32.mrb[0].mxu0
  %v346 = vadd.f32 %v266, %v345
  %v347 = vpop.f32.mrb[0].mxu0
  %348 = vmatprep.mubr.bf16.mxu0 0
  %349 = vmatmul.mubr.bf16.gmra.mrb[0].mxu0 %v290
  %v350 = vpop.f32.mrb[0].mxu0
  %v351 = vadd.f32 %v266, %v350
  %v352 = vpop.f32.mrb[0].mxu0
  %v353 = vpop.f32.mrb[0].mxu0
  %v354 = vadd.f32 %v266, %v353
  %v355 = vpop.f32.mrb[0].mxu0
  %356 = vdwg.mxu0
  %vm357 = vcmask 64512
  %358 = vst.msk [vmem:[%s7] sm:$0xff] %vm357, %v327
  %359 = vst.msk [vmem:[%s7 + $0x8] sm:$0xff] %vm357, %v330
  %360 = vst.msk [vmem:[%s7 + $0x10] sm:$0xff] %vm357, %v335
  %361 = vst.msk [vmem:[%s7 + $0x18] sm:$0xff] %vm357, %v338
  %362 = vst.msk [vmem:[%s7 + $0x20] sm:$0xff] %vm357, %v343
  %363 = vst.msk [vmem:[%s7 + $0x28] sm:$0xff] %vm357, %v346
  %364 = vst.msk [vmem:[%s7 + $0x30] sm:$0xff] %vm357, %v351
  %365 = vst.msk [vmem:[%s7 + $0x38] sm:$0xff] %vm357, %v354
  // Predicated region
  $region30: #{dqn_forward.1} parent=0 // pred_check
    _
  $region31: #{dqn_forward.1} parent=0 // pred_check_branch
    %367 = sbr.rel (0) target = $region33
  $region32: #{dqn_forward.1} parent=0 // pred_region
    _
  $region33: #{dqn_forward.1} parent=0 // pred_fallthru
    _
  // Predicated region
  $region34: #{dqn_forward.1} parent=0 // pred_check
    _
  $region35: #{dqn_forward.1} parent=0 // pred_check_branch
    %369 = sbr.rel (0) target = $region37
  $region36: #{dqn_forward.1} parent=0 // pred_region
    _
  $region37: #{dqn_forward.1} parent=0 // pred_fallthru
    _

</llo_original>
